<compile_context>
chip_gen: v5e
topology: v5e:2x2
jax: 0.10.0
libtpu: 0.0.40
codegen_flags: <defaults>
</compile_context>

<pallas_src>
import numpy as np
import jax
import jax.numpy as jnp
from jax.experimental import pallas as pl
from jax.experimental.pallas import tpu as pltpu

BIAS_FINAL_INIT = 0.0003
WEIGHT_FINAL_INIT = 0.003
BN_EPS = 1e-5
LANE = 128  # TPU lane width (f32)


def _bn_relu(h, gamma, beta):
    """Training-mode BatchNorm1d (biased variance) fused with affine + ReLU.

    gamma/beta are (1, 128) rows; lanes beyond the real feature width are
    zero, which forces padded output columns to exactly zero."""
    mean = jnp.mean(h, axis=0, keepdims=True)
    mean_sq = jnp.mean(h * h, axis=0, keepdims=True)
    var = jnp.maximum(mean_sq - mean * mean, 0.0)   # clamp: cancellation guard
    scale = gamma * jax.lax.rsqrt(var + BN_EPS)     # rsqrt -> EUP slot
    shift = beta - mean * scale
    return jnp.maximum(h * scale + shift, 0.0)


def make_actor_kernel(num_inputs, n_in_pad):
    """Build the kernel with static row offsets into the packed param tile."""
    r_w2 = n_in_pad          # w2 rows:  [r_w2, r_w2 + 128)
    r_w3 = r_w2 + LANE       # w3 rows:  [r_w3, r_w3 + 128)
    r_vec = r_w3 + LANE      # vec rows: gamma1, beta1, gamma2, beta2, b3, 0,0,0

    def actor_kernel(x_ref, p_ref, out_ref):
        w1 = p_ref[0:num_inputs, :]
        w2 = p_ref[r_w2:r_w2 + LANE, :]
        w3 = p_ref[r_w3:r_w3 + LANE, :]
        g1 = p_ref[r_vec + 0:r_vec + 1, :]
        be1 = p_ref[r_vec + 1:r_vec + 2, :]
        g2 = p_ref[r_vec + 2:r_vec + 3, :]
        be2 = p_ref[r_vec + 3:r_vec + 4, :]
        b3 = p_ref[r_vec + 4:r_vec + 5, :]

        x = x_ref[...]

        # Layer 1: Linear (bias cancelled by BN) -> BN -> ReLU   (B, 128)
        h = jnp.dot(x, w1, preferred_element_type=jnp.float32)
        h = _bn_relu(h, g1, be1)

        # Layer 2: Linear (bias cancelled by BN) -> BN -> ReLU   (B, 128)
        h = jnp.dot(h, w2, preferred_element_type=jnp.float32)
        h = _bn_relu(h, g2, be2)

        # Output: Linear -> tanh, lane-dense unmasked (B, 128) store.
        o = jnp.dot(h, w3, preferred_element_type=jnp.float32) + b3
        out_ref[...] = jnp.tanh(o)

    return actor_kernel


def prepare_actor_params(params):
    """One-time param prep (hoisted out of the hot path).

    Zero-pads the three weight matrices to 128 output lanes and concatenates
    them with the BN gamma/beta and output bias rows into a single
    (n_in_pad + 2*128 + 8, 128) f32 operand -> one DMA per forward call.
    b1/b2 are elided: training-mode BN cancels pre-BN biases exactly."""
    (w1, b1, g1, be1, w2, b2, g2, be2, w3, b3) = params
    del b1, b2  # mathematical no-ops under training-mode BatchNorm

    num_inputs, h1 = w1.shape
    h2 = w2.shape[1]
    num_outputs = w3.shape[1]
    assert h1 <= LANE and h2 <= LANE and num_outputs <= LANE, (
        "packed param tile assumes feature dims <= 128")
    n_in_pad = ((num_inputs + 7) // 8) * 8  # sublane-align the w1 block

    def pad2(m, rows, cols):
        return jnp.pad(m.astype(jnp.float32),
                       ((0, rows - m.shape[0]), (0, cols - m.shape[1])))

    def pad_row(v):  # (1, n) -> (1, 128)
        return jnp.pad(v.astype(jnp.float32), ((0, 0), (0, LANE - v.shape[1])))

    packed = jnp.concatenate([
        pad2(w1, n_in_pad, LANE),            # rows [0, n_in_pad)
        pad2(w2, LANE, LANE),                # rows [n_in_pad, n_in_pad+128)
        pad2(w3, LANE, LANE),                # rows [.., ..+128)
        pad_row(g1), pad_row(be1),           # gamma1, beta1
        pad_row(g2), pad_row(be2),           # gamma2, beta2
        pad_row(b3),                         # output bias
        jnp.zeros((3, LANE), jnp.float32),   # pad to a multiple of 8 rows
    ], axis=0)

    return {"packed": packed, "num_inputs": int(num_inputs),
            "n_in_pad": int(n_in_pad), "num_outputs": int(num_outputs)}


def actor_forward(x, prep):
    """Hot path: one pallas_call, two input DMAs (x + packed params).

    Returns the padded (B, 128) output; the consumer slices
    [:, :prep['num_outputs']] once (kept outside the hot path on purpose)."""
    B = x.shape[0]
    kernel = make_actor_kernel(prep["num_inputs"], prep["n_in_pad"])
    vmem = pl.BlockSpec(memory_space=pltpu.MemorySpace.VMEM)
    return pl.pallas_call(
        kernel,
        out_shape=jax.ShapeDtypeStruct((B, LANE), jnp.float32),
        in_specs=[vmem, vmem],
        out_specs=vmem,
    )(x, prep["packed"])


def init_actor_params(key, num_inputs, hidden_size, num_outputs):
    """Deterministic init matching the PyTorch module's init scheme.

    Weights are stored as (in_features, out_features), so the kernel computes
    x @ W + b (equivalent to PyTorch's x @ W.T + b)."""
    k1w, k1b, k2w, k2b, k3w, k3b = jax.random.split(key, 6)
    h1, h2 = hidden_size

    def fan_in_uniform(k, shape, fan_in):
        w = 1.0 / np.sqrt(fan_in)
        return jax.random.uniform(k, shape, jnp.float32, minval=-w, maxval=w)

    # linear1: PyTorch weight (h1, num_inputs) -> fan_in = num_inputs
    w1 = fan_in_uniform(k1w, (num_inputs, h1), num_inputs)
    b1 = fan_in_uniform(k1b, (1, h1), h1)   # fan_in_uniform_init(bias): fan_in = bias.size(-1)
    g1 = jnp.ones((1, h1), jnp.float32)
    be1 = jnp.zeros((1, h1), jnp.float32)

    # linear2: PyTorch weight (h2, h1) -> fan_in = h1
    w2 = fan_in_uniform(k2w, (h1, h2), h1)
    b2 = fan_in_uniform(k2b, (1, h2), h2)
    g2 = jnp.ones((1, h2), jnp.float32)
    be2 = jnp.zeros((1, h2), jnp.float32)

    # output layer: uniform(+-WEIGHT_FINAL_INIT / +-BIAS_FINAL_INIT)
    w3 = jax.random.uniform(k3w, (h2, num_outputs), jnp.float32,
                            minval=-WEIGHT_FINAL_INIT, maxval=WEIGHT_FINAL_INIT)
    b3 = jax.random.uniform(k3b, (1, num_outputs), jnp.float32,
                            minval=-BIAS_FINAL_INIT, maxval=BIAS_FINAL_INIT)

    return (w1, b1, g1, be1, w2, b2, g2, be2, w3, b3)


def actor_reference(x, params):
    """Pure-JAX reference of the PyTorch forward (includes b1/b2 to verify
    that eliding them in the kernel is exact)."""
    (w1, b1, g1, be1, w2, b2, g2, be2, w3, b3) = params

    def bn_relu(h, g, be):
        mean = jnp.mean(h, axis=0, keepdims=True)
        var = jnp.mean((h - mean) ** 2, axis=0, keepdims=True)
        return jnp.maximum((h - mean) / jnp.sqrt(var + BN_EPS) * g + be, 0.0)

    h1 = bn_relu(x @ w1 + b1, g1, be1)
    h2 = bn_relu(h1 @ w2 + b2, g2, be2)
    return jnp.tanh(h2 @ w3 + b3)


if __name__ == "__main__":
    # Small shapes consistent with the module: state dim 16, hidden [64, 32],
    # action dim 4, batch 8 (multiple of the f32 sublane tile; BN training
    # mode needs batch > 1).
    B, num_inputs = 8, 16
    hidden_size = (64, 32)
    num_outputs = 4

    key = jax.random.PRNGKey(0)
    kx, kp = jax.random.split(key)
    x = jax.random.normal(kx, (B, num_inputs), jnp.float32)
    params = init_actor_params(kp, num_inputs, hidden_size, num_outputs)

    # One-time parameter prep (outside the hot path).
    prep = prepare_actor_params(params)
    prep["packed"] = jax.block_until_ready(prep["packed"])

    # Hot path: single pallas_call; consumer slices the padded lanes once.
    out_padded = actor_forward(x, prep)
    out_padded = jax.block_until_ready(out_padded)
    out = np.asarray(out_padded)[:, :prep["num_outputs"]]

    ref = np.asarray(actor_reference(x, params))
    np.testing.assert_allclose(out, ref, rtol=1e-4, atol=1e-5)
    assert out.shape == (B, num_outputs)
    # Padded output lanes must be exactly tanh(0) = 0.
    assert np.all(np.asarray(out_padded)[:, prep["num_outputs"]:] == 0.0)

    print("KERNEL_OK")
</pallas_src>

<mosaic_0001>
module attributes {stable_mosaic.version = 11 : i64} {
  func.func @actor_kernel(%arg0: memref<8x16xf32, #tpu.memory_space<vmem>>, %arg1: memref<280x128xf32, #tpu.memory_space<vmem>>, %arg2: memref<8x128xf32, #tpu.memory_space<vmem>>) attributes {dimension_semantics = [], scalar_prefetch = 0 : i64, scratch_operands = 0 : i64, tpu.core_type = #tpu.core_type<tc>} {
    %c0 = arith.constant 0 : index
    %c0_0 = arith.constant 0 : index
    %0 = vector.load %arg1[%c0, %c0_0] : memref<280x128xf32, #tpu.memory_space<vmem>>, vector<16x128xf32>
    %c16 = arith.constant 16 : index
    %c0_1 = arith.constant 0 : index
    %1 = vector.load %arg1[%c16, %c0_1] : memref<280x128xf32, #tpu.memory_space<vmem>>, vector<128x128xf32>
    %c144 = arith.constant 144 : index
    %c0_2 = arith.constant 0 : index
    %2 = vector.load %arg1[%c144, %c0_2] : memref<280x128xf32, #tpu.memory_space<vmem>>, vector<128x128xf32>
    %c272 = arith.constant 272 : index
    %c0_3 = arith.constant 0 : index
    %3 = vector.load %arg1[%c272, %c0_3] : memref<280x128xf32, #tpu.memory_space<vmem>>, vector<1x128xf32>
    %c273 = arith.constant 273 : index
    %c0_4 = arith.constant 0 : index
    %4 = vector.load %arg1[%c273, %c0_4] : memref<280x128xf32, #tpu.memory_space<vmem>>, vector<1x128xf32>
    %c274 = arith.constant 274 : index
    %c0_5 = arith.constant 0 : index
    %5 = vector.load %arg1[%c274, %c0_5] : memref<280x128xf32, #tpu.memory_space<vmem>>, vector<1x128xf32>
    %c275 = arith.constant 275 : index
    %c0_6 = arith.constant 0 : index
    %6 = vector.load %arg1[%c275, %c0_6] : memref<280x128xf32, #tpu.memory_space<vmem>>, vector<1x128xf32>
    %c276 = arith.constant 276 : index
    %c0_7 = arith.constant 0 : index
    %7 = vector.load %arg1[%c276, %c0_7] : memref<280x128xf32, #tpu.memory_space<vmem>>, vector<1x128xf32>
    %c0_8 = arith.constant 0 : index
    %c0_9 = arith.constant 0 : index
    %8 = vector.load %arg0[%c0_8, %c0_9] : memref<8x16xf32, #tpu.memory_space<vmem>>, vector<8x16xf32>
    %cst = arith.constant dense<0.000000e+00> : vector<8x128xf32>
    %9 = tpu.matmul %8, %0, %cst {dimension_numbers = #tpu.dot_dimension_numbers<[1], [0], [0], [1], [0, 0, 1, 1], [], []>} : vector<8x16xf32>, vector<16x128xf32>, vector<8x128xf32> -> vector<8x128xf32>
    %cst_10 = arith.constant dense<0.000000e+00> : vector<128xf32>
    %10 = vector.multi_reduction <add>, %9, %cst_10 [0] : vector<8x128xf32> to vector<128xf32>
    %11 = vector.shape_cast %10 : vector<128xf32> to vector<1x128xf32>
    %cst_11 = arith.constant 8.000000e+00 : f32
    %12 = vector.broadcast %cst_11 : f32 to vector<1x128xf32>
    %13 = arith.divf %11, %12 : vector<1x128xf32>
    %14 = arith.mulf %9, %9 : vector<8x128xf32>
    %cst_12 = arith.constant dense<0.000000e+00> : vector<128xf32>
    %15 = vector.multi_reduction <add>, %14, %cst_12 [0] : vector<8x128xf32> to vector<128xf32>
    %16 = vector.shape_cast %15 : vector<128xf32> to vector<1x128xf32>
    %cst_13 = arith.constant 8.000000e+00 : f32
    %17 = vector.broadcast %cst_13 : f32 to vector<1x128xf32>
    %18 = arith.divf %16, %17 : vector<1x128xf32>
    %19 = arith.mulf %13, %13 : vector<1x128xf32>
    %20 = arith.subf %18, %19 : vector<1x128xf32>
    %cst_14 = arith.constant 0.000000e+00 : f32
    %21 = vector.broadcast %cst_14 : f32 to vector<1x128xf32>
    %22 = arith.maximumf %20, %21 : vector<1x128xf32>
    %cst_15 = arith.constant 9.99999974E-6 : f32
    %23 = vector.broadcast %cst_15 : f32 to vector<1x128xf32>
    %24 = arith.addf %22, %23 : vector<1x128xf32>
    %25 = math.rsqrt %24 : vector<1x128xf32>
    %26 = arith.mulf %3, %25 : vector<1x128xf32>
    %27 = arith.mulf %13, %26 : vector<1x128xf32>
    %28 = arith.subf %4, %27 : vector<1x128xf32>
    %29 = vector.broadcast %26 : vector<1x128xf32> to vector<8x128xf32>
    %30 = arith.mulf %9, %29 : vector<8x128xf32>
    %31 = vector.broadcast %28 : vector<1x128xf32> to vector<8x128xf32>
    %32 = arith.addf %30, %31 : vector<8x128xf32>
    %cst_16 = arith.constant 0.000000e+00 : f32
    %33 = vector.broadcast %cst_16 : f32 to vector<8x128xf32>
    %34 = arith.maximumf %32, %33 : vector<8x128xf32>
    %cst_17 = arith.constant dense<0.000000e+00> : vector<8x128xf32>
    %35 = tpu.matmul %34, %1, %cst_17 {dimension_numbers = #tpu.dot_dimension_numbers<[1], [0], [0], [1], [0, 0, 1, 1], [], []>} : vector<8x128xf32>, vector<128x128xf32>, vector<8x128xf32> -> vector<8x128xf32>
    %cst_18 = arith.constant dense<0.000000e+00> : vector<128xf32>
    %36 = vector.multi_reduction <add>, %35, %cst_18 [0] : vector<8x128xf32> to vector<128xf32>
    %37 = vector.shape_cast %36 : vector<128xf32> to vector<1x128xf32>
    %cst_19 = arith.constant 8.000000e+00 : f32
    %38 = vector.broadcast %cst_19 : f32 to vector<1x128xf32>
    %39 = arith.divf %37, %38 : vector<1x128xf32>
    %40 = arith.mulf %35, %35 : vector<8x128xf32>
    %cst_20 = arith.constant dense<0.000000e+00> : vector<128xf32>
    %41 = vector.multi_reduction <add>, %40, %cst_20 [0] : vector<8x128xf32> to vector<128xf32>
    %42 = vector.shape_cast %41 : vector<128xf32> to vector<1x128xf32>
    %cst_21 = arith.constant 8.000000e+00 : f32
    %43 = vector.broadcast %cst_21 : f32 to vector<1x128xf32>
    %44 = arith.divf %42, %43 : vector<1x128xf32>
    %45 = arith.mulf %39, %39 : vector<1x128xf32>
    %46 = arith.subf %44, %45 : vector<1x128xf32>
    %cst_22 = arith.constant 0.000000e+00 : f32
    %47 = vector.broadcast %cst_22 : f32 to vector<1x128xf32>
    %48 = arith.maximumf %46, %47 : vector<1x128xf32>
    %cst_23 = arith.constant 9.99999974E-6 : f32
    %49 = vector.broadcast %cst_23 : f32 to vector<1x128xf32>
    %50 = arith.addf %48, %49 : vector<1x128xf32>
    %51 = math.rsqrt %50 : vector<1x128xf32>
    %52 = arith.mulf %5, %51 : vector<1x128xf32>
    %53 = arith.mulf %39, %52 : vector<1x128xf32>
    %54 = arith.subf %6, %53 : vector<1x128xf32>
    %55 = vector.broadcast %52 : vector<1x128xf32> to vector<8x128xf32>
    %56 = arith.mulf %35, %55 : vector<8x128xf32>
    %57 = vector.broadcast %54 : vector<1x128xf32> to vector<8x128xf32>
    %58 = arith.addf %56, %57 : vector<8x128xf32>
    %cst_24 = arith.constant 0.000000e+00 : f32
    %59 = vector.broadcast %cst_24 : f32 to vector<8x128xf32>
    %60 = arith.maximumf %58, %59 : vector<8x128xf32>
    %cst_25 = arith.constant dense<0.000000e+00> : vector<8x128xf32>
    %61 = tpu.matmul %60, %2, %cst_25 {dimension_numbers = #tpu.dot_dimension_numbers<[1], [0], [0], [1], [0, 0, 1, 1], [], []>} : vector<8x128xf32>, vector<128x128xf32>, vector<8x128xf32> -> vector<8x128xf32>
    %62 = vector.broadcast %7 : vector<1x128xf32> to vector<8x128xf32>
    %63 = arith.addf %61, %62 : vector<8x128xf32>
    %64 = math.tanh %63 : vector<8x128xf32>
    %c0_26 = arith.constant 0 : index
    %c0_27 = arith.constant 0 : index
    %65 = vector.load %arg2[%c0_26, %c0_27] : memref<8x128xf32, #tpu.memory_space<vmem>>, vector<8x128xf32>
    tpu.vector_store %arg2[%c0_26, %c0_27], %64 {strides = array<i32>} : memref<8x128xf32, #tpu.memory_space<vmem>>, vector<8x128xf32>,
    return
  }
}

</mosaic_0001>

<llo_original>
// kernel: tpu_custom_call.1
$region0: #{tpu_custom_call.1}
  #allocation0 [shape = 'u32[]', space=smem, size = 0x4, offset = 0x4, fixed_abs, tag = 'smem constant byte address 0x4 - core index']
  #allocation1 [shape = 'u32[72,128]{1,0:T(1,128)}', space=vmem, size = 0x9000, scoped, tag = 'internal scratch']
  %s0 = inlined_call_operand.hbm [shape: f32[8,16], index: 0, kind: input, shape index: {}]
  %s1 = inlined_call_operand.hbm [shape: f32[280,128], index: 1, kind: input, shape index: {}]
  %s2 = inlined_call_operand.hbm [shape: f32[8,128], index: 2, kind: output, shape index: {}]
  %s3 = sld [smem:[#allocation0]]
  $region26: #{tpu_custom_call.1} parent=0
    _
  %s5 = ssub.s32 1, %s3
  %s6 = scalar_select 0, %s5, %s3
  $region1: #{tpu_custom_call.1} parent=0
    #allocation2 [shape = 'u8[4096]{0}', space=vmem, size = 0x1000, scoped, tag = 'input window, operand 0, single buffered']
    #allocation3 [shape = 's32[1]{0}', space=sflag, size = 0x4, scoped, tag = 'scoped memory for tpu_custom_call.1']
    #allocation4 [shape = 's32[1]{0}', space=sflag, size = 0x4, scoped, tag = 'scoped memory for tpu_custom_call.1']
    #allocation5 [shape = 'u8[143360]{0}', space=vmem, size = 0x23000, scoped, tag = 'input window, operand 1, single buffered']
    #allocation6 [shape = 's32[1]{0}', space=sflag, size = 0x4, scoped, tag = 'scoped memory for tpu_custom_call.1']
    #allocation7 [shape = 'u8[4096]{0}', space=vmem, size = 0x1000, scoped, tag = 'output window, operand 0, single buffered']
    %7 = vsyncpa [#allocation3], 0
    %8 = vsyncpa [#allocation6], 0
    %9 = vsyncpa [#allocation4], 0
    // Predicated region
    $region2: #{tpu_custom_call.1} parent=1 // pred_check
      _
    $region3: #{tpu_custom_call.1} parent=1 // pred_check_branch
      %11 = sbr.rel (0) target = $region5
    $region4: #{tpu_custom_call.1} parent=1 // pred_region
      %13 = vsyncadd [#allocation3], 0
      %s15 = sshll.u32 %s0, 4
      %s16 = int_to_ptr.hbm [resolvable:$true] %s15
      %s17 = sshll.u32 [#allocation2], 4
      %s18 = int_to_ptr.vmem [resolvable:$true] %s17
      %20 = dma.hbm_to_vmem [thread:$0]  %s16, 128, %s18, [#allocation3]
    $region5: #{tpu_custom_call.1} parent=1 // pred_fallthru
      _
    // Predicated region
    $region6: #{tpu_custom_call.1} parent=1 // pred_check
      _
    $region7: #{tpu_custom_call.1} parent=1 // pred_check_branch
      %22 = sbr.rel (0) target = $region9
    $region8: #{tpu_custom_call.1} parent=1 // pred_region
      %24 = vsyncadd [#allocation6], 0
      %s25 = sshll.u32 %s1, 4
      %s26 = int_to_ptr.hbm [resolvable:$true] %s25
      %s27 = sshll.u32 [#allocation5], 4
      %s28 = int_to_ptr.vmem [resolvable:$true] %s27
      %33 = dma.hbm_to_vmem [thread:$0]  %s26, 4480, %s28, [#allocation6], 128, 128, 8
    $region9: #{tpu_custom_call.1} parent=1 // pred_fallthru
      _
    // Predicated region
    $region10: #{tpu_custom_call.1} parent=1 // pred_check
      _
    $region11: #{tpu_custom_call.1} parent=1 // pred_check_branch
      %35 = sbr.rel (0) target = $region13
    $region12: #{tpu_custom_call.1} parent=1 // pred_region
      %37 = dma.done [#allocation3], 128
    $region13: #{tpu_custom_call.1} parent=1 // pred_fallthru
      _
    // Predicated region
    $region14: #{tpu_custom_call.1} parent=1 // pred_check
      _
    $region15: #{tpu_custom_call.1} parent=1 // pred_check_branch
      %39 = sbr.rel (0) target = $region17
    $region16: #{tpu_custom_call.1} parent=1 // pred_region
      %41 = dma.done [#allocation6], 4480
    $region17: #{tpu_custom_call.1} parent=1 // pred_fallthru
      _
    %v42 = vld [vmem:[#allocation5] sm:$0xff]
    %v43 = vld [vmem:[#allocation5 + $0x8] sm:$0xff]
    %v44 = vld [vmem:[#allocation5 + $0x10] sm:$0xff]
    %v45 = vld [vmem:[#allocation5 + $0x18] sm:$0xff]
    %v46 = vld [vmem:[#allocation5 + $0x20] sm:$0xff]
    %v47 = vld [vmem:[#allocation5 + $0x28] sm:$0xff]
    %v48 = vld [vmem:[#allocation5 + $0x30] sm:$0xff]
    %v49 = vld [vmem:[#allocation5 + $0x38] sm:$0xff]
    %v50 = vld [vmem:[#allocation5 + $0x40] sm:$0xff]
    %v51 = vld [vmem:[#allocation5 + $0x48] sm:$0xff]
    %v52 = vld [vmem:[#allocation5 + $0x50] sm:$0xff]
    %v53 = vld [vmem:[#allocation5 + $0x58] sm:$0xff]
    %v54 = vld [vmem:[#allocation5 + $0x60] sm:$0xff]
    %v55 = vld [vmem:[#allocation5 + $0x68] sm:$0xff]
    %v56 = vld [vmem:[#allocation5 + $0x70] sm:$0xff]
    %v57 = vld [vmem:[#allocation5 + $0x78] sm:$0xff]
    %v58 = vld [vmem:[#allocation5 + $0x80] sm:$0xff]
    %v59 = vld [vmem:[#allocation5 + $0x88] sm:$0xff]
    %v60 = vld [vmem:[#allocation5 + $0x90] sm:$0xff]
    %v61 = vld [vmem:[#allocation5 + $0x98] sm:$0xff]
    %v62 = vld [vmem:[#allocation5 + $0xa0] sm:$0xff]
    %v63 = vld [vmem:[#allocation5 + $0xa8] sm:$0xff]
    %v64 = vld [vmem:[#allocation5 + $0xb0] sm:$0xff]
    %v65 = vld [vmem:[#allocation5 + $0xb8] sm:$0xff]
    %v66 = vld [vmem:[#allocation5 + $0xc0] sm:$0xff]
    %v67 = vld [vmem:[#allocation5 + $0xc8] sm:$0xff]
    %v68 = vld [vmem:[#allocation5 + $0xd0] sm:$0xff]
    %v69 = vld [vmem:[#allocation5 + $0xd8] sm:$0xff]
    %v70 = vld [vmem:[#allocation5 + $0xe0] sm:$0xff]
    %v71 = vld [vmem:[#allocation5 + $0xe8] sm:$0xff]
    %v72 = vld [vmem:[#allocation5 + $0xf0] sm:$0xff]
    %v73 = vld [vmem:[#allocation5 + $0xf8] sm:$0xff]
    %v74 = vld [vmem:[#allocation5 + $0x100] sm:$0xff]
    %v75 = vld [vmem:[#allocation5 + $0x108] sm:$0xff]
    %v76 = vld [vmem:[#allocation5 + $0x110] sm:$0x1]
    %v77 = vld [vmem:[#allocation5 + $0x111] sm:$0x1]
    %v78 = vld [vmem:[#allocation5 + $0x112] sm:$0x1]
    %v79 = vld [vmem:[#allocation5 + $0x113] sm:$0x1]
    %v80 = vld [vmem:[#allocation5 + $0x114] sm:$0x1]
    %v81 = vld [vmem:[#allocation2] sm:$0xff]
    %vm82 = vcmask 130048
    %v84 = vsel %vm82, %v81, 0
    %86 = vmatpush.msra.mxu0 0.0
    %87 = vmatpush.msra.mxu0 0.0
    %88 = vmatpush.msra.mxu0 0.0
    %89 = vmatpush.msra.mxu0 0.0
    %90 = vmatpush.msra.mxu0 0.0
    %91 = vmatpush.msra.mxu0 0.0
    %92 = vmatpush.msra.mxu0 0.0
    %93 = vmatpush.msra.mxu0 0.0
    %94 = vmatpush.msra.mxu0 0.0
    %95 = vmatpush.msra.mxu0 0.0
    %96 = vmatpush.msra.mxu0 0.0
    %97 = vmatpush.msra.mxu0 0.0
    %98 = vmatpush.msra.mxu0 0.0
    %99 = vmatpush.msra.mxu0 0.0
    %100 = vmatpush.msra.mxu0 %v43
    %101 = vmatpush.msra.mxu0 %v42
    %102 = vmatmul.f32.gmra.mxu0 %v84
    %v103 = vpop.f32.mrf.mxu0
    %v104 = vadd.f32 0.0, %v103
    %105 = vdwg.mxu0
    %v106 = vrot.slane %v104, 4
    %v107 = vadd.f32 %v104, %v106
    %v108 = vrot.slane %v107, 2
    %v109 = vadd.f32 %v107, %v108
    %v110 = vrot.slane %v109, 1
    %v111 = vadd.f32 %v109, %v110
    %v112 = vrcp.pop 8.0
    %v113 = vmul.f32 8.0, %v112
    %v114 = vsub.f32 1.0, %v113
    %v115 = vmul.f32 %v112, %v114
    %v116 = vadd.f32 %v112, %v115
    %vm117 = vweird.f32 %v112
    %v118 = vsel %vm117, %v112, %v116
    %v119 = vmul.f32 %v111, %v118
    %v120 = vmul.f32 %v104, %v104
    %v121 = vrot.slane %v120, 4
    %v122 = vadd.f32 %v120, %v121
    %v123 = vrot.slane %v122, 2
    %v124 = vadd.f32 %v122, %v123
    %v125 = vrot.slane %v124, 1
    %v126 = vadd.f32 %v124, %v125
    %v127 = vmul.f32 %v126, %v118
    %v128 = vmul.f32 %v119, %v119
    %v129 = vsub.f32 %v127, %v128
    %v130 = vmax.f32 %v129, 0.0
    %v131 = vadd.f32 %v130, 1e-05
    %v132 = vrsqrt.pop %v131
    %v133 = vmul.f32 %v132, %v131
    %v134 = vmul.f32 %v133, %v132
    %v135 = vmul.f32 0.5, %v134
    %v136 = vsub.f32 1.5, %v135
    %v137 = vmul.f32 %v132, %v136
    %vm138 = vweird.f32 %v131
    %vm139 = vweird.f32 %v132
    %vm140 = vmor %vm138, %vm139
    %v141 = vsel %vm140, %v132, %v137
    %v142 = vmul.f32 %v76, %v141
    %v143 = vmul.f32 %v119, %v142
    %v144 = vsub.f32 %v77, %v143
    %v145 = vperm.slane %v142, 0
    %v146 = vmul.f32 %v104, %v145
    %v147 = vperm.slane %v144, 0
    %v148 = vadd.f32 %v146, %v147
    %v149 = vmax.f32 %v148, 0.0
    %150 = vmatpush.msra.mxu0 %v59
    %151 = vmatpush.msra.mxu0 %v58
    %152 = vmatpush.msra.mxu0 %v57
    %153 = vmatpush.msra.mxu0 %v56
    %154 = vmatpush.msra.mxu0 %v55
    %155 = vmatpush.msra.mxu0 %v54
    %156 = vmatpush.msra.mxu0 %v53
    %157 = vmatpush.msra.mxu0 %v52
    %158 = vmatpush.msra.mxu0 %v51
    %159 = vmatpush.msra.mxu0 %v50
    %160 = vmatpush.msra.mxu0 %v49
    %161 = vmatpush.msra.mxu0 %v48
    %162 = vmatpush.msra.mxu0 %v47
    %163 = vmatpush.msra.mxu0 %v46
    %164 = vmatpush.msra.mxu0 %v45
    %165 = vmatpush.msra.mxu0 %v44
    %166 = vmatmul.f32.gmra.mxu0 %v149
    %v167 = vpop.f32.mrf.mxu0
    %v168 = vadd.f32 0.0, %v167
    %169 = vdwg.mxu0
    %v170 = vrot.slane %v168, 4
    %v171 = vadd.f32 %v168, %v170
    %v172 = vrot.slane %v171, 2
    %v173 = vadd.f32 %v171, %v172
    %v174 = vrot.slane %v173, 1
    %v175 = vadd.f32 %v173, %v174
    %v176 = vmul.f32 %v175, %v118
    %v177 = vmul.f32 %v168, %v168
    %v178 = vrot.slane %v177, 4
    %v179 = vadd.f32 %v177, %v178
    %v180 = vrot.slane %v179, 2
    %v181 = vadd.f32 %v179, %v180
    %v182 = vrot.slane %v181, 1
    %v183 = vadd.f32 %v181, %v182
    %v184 = vmul.f32 %v183, %v118
    %v185 = vmul.f32 %v176, %v176
    %v186 = vsub.f32 %v184, %v185
    %v187 = vmax.f32 %v186, 0.0
    %v188 = vadd.f32 %v187, 1e-05
    %v189 = vrsqrt.pop %v188
    %v190 = vmul.f32 %v189, %v188
    %v191 = vmul.f32 %v190, %v189
    %v192 = vmul.f32 0.5, %v191
    %v193 = vsub.f32 1.5, %v192
    %v194 = vmul.f32 %v189, %v193
    %vm195 = vweird.f32 %v188
    %vm196 = vweird.f32 %v189
    %vm197 = vmor %vm195, %vm196
    %v198 = vsel %vm197, %v189, %v194
    %v199 = vmul.f32 %v78, %v198
    %v200 = vmul.f32 %v176, %v199
    %v201 = vsub.f32 %v79, %v200
    %v202 = vperm.slane %v199, 0
    %v203 = vmul.f32 %v168, %v202
    %v204 = vperm.slane %v201, 0
    %v205 = vadd.f32 %v203, %v204
    %v206 = vmax.f32 %v205, 0.0
    %v207 = vperm.slane %v80, 0
    %208 = vmatpush.msra.mxu0 %v75
    %209 = vmatpush.msra.mxu0 %v74
    %210 = vmatpush.msra.mxu0 %v73
    %211 = vmatpush.msra.mxu0 %v72
    %212 = vmatpush.msra.mxu0 %v71
    %213 = vmatpush.msra.mxu0 %v70
    %214 = vmatpush.msra.mxu0 %v69
    %215 = vmatpush.msra.mxu0 %v68
    %216 = vmatpush.msra.mxu0 %v67
    %217 = vmatpush.msra.mxu0 %v66
    %218 = vmatpush.msra.mxu0 %v65
    %219 = vmatpush.msra.mxu0 %v64
    %220 = vmatpush.msra.mxu0 %v63
    %221 = vmatpush.msra.mxu0 %v62
    %222 = vmatpush.msra.mxu0 %v61
    %223 = vmatpush.msra.mxu0 %v60
    %224 = vmatmul.f32.gmra.mxu0 %v206
    %v225 = vpop.f32.mrf.mxu0
    %v226 = vadd.f32 %v207, %v225
    %227 = vdwg.mxu0
    %v228 = vtanh.pop %v226
    %229 = vst [vmem:[#allocation7] sm:$0xff] %v228
    // Predicated region
    $region18: #{tpu_custom_call.1} parent=1 // pred_check
      _
    $region19: #{tpu_custom_call.1} parent=1 // pred_check_branch
      %231 = sbr.rel (0) target = $region21
    $region20: #{tpu_custom_call.1} parent=1 // pred_region
      %233 = vsyncadd [#allocation4], 0
      %s235 = sshll.u32 [#allocation7], 4
      %s236 = int_to_ptr.vmem [resolvable:$true] %s235
      %s237 = sshll.u32 %s2, 4
      %s238 = int_to_ptr.hbm [resolvable:$true] %s237
      %240 = dma.vmem_to_hbm [thread:$0]  %s236, 128, %s238, [#allocation4]
    $region21: #{tpu_custom_call.1} parent=1 // pred_fallthru
      _
    // Predicated region
    $region22: #{tpu_custom_call.1} parent=1 // pred_check
      _
    $region23: #{tpu_custom_call.1} parent=1 // pred_check_branch
      %242 = sbr.rel (0) target = $region25
    $region24: #{tpu_custom_call.1} parent=1 // pred_region
      %244 = dma.done [#allocation4], 128
    $region25: #{tpu_custom_call.1} parent=1 // pred_fallthru
      _
    %245 = vsyncpa [#allocation3], 1
    %246 = vsyncpa [#allocation6], 1
    %247 = vsyncpa [#allocation4], 1

</llo_original>
